<compile_context>
chip_gen: v7x
topology: tpu7x:2x2x1
jax: 0.10.0
libtpu: 0.0.40
codegen_flags: <defaults>
</compile_context>

<pallas_src>
import functools

import jax
import jax.numpy as jnp
from jax.experimental import pallas as pl
from jax.experimental.pallas import tpu as pltpu


def _round_up(n, m):
    return ((n + m - 1) // m) * m


def _cdiv(a, b):
    return (a + b - 1) // b


# ---------------------------------------------------------------------------
# Kernel body: one batch tile through fc1 -> sin -> hadamard -> tanh -> fc2.
# q_transform is pre-folded into w1/b1 at param-prep time, so there is no
# in-kernel multiply by q.  MXU operands are bf16, accumulation and all
# elementwise math (bias add, sin, tanh) stay in f32 (v5e VPU/EUP-safe).
# ---------------------------------------------------------------------------
def aqkan_kernel(x_ref, w1_ref, b1_ref, wh_ref, bh_ref, w2_ref, b2_ref, o_ref):
    x = x_ref[...]                                       # (TILE_B, D_in_p) bf16
    # fc1 (q folded into weights/bias already)
    h = jnp.dot(x, w1_ref[...], preferred_element_type=jnp.float32) + b1_ref[...]
    h = jnp.sin(h)
    # hadamard linear layer
    h = jnp.dot(h.astype(jnp.bfloat16), wh_ref[...],
                preferred_element_type=jnp.float32) + bh_ref[...]
    h = jnp.tanh(h)
    # fc2
    out = jnp.dot(h.astype(jnp.bfloat16), w2_ref[...],
                  preferred_element_type=jnp.float32) + b2_ref[...]
    o_ref[...] = out.astype(o_ref.dtype)


def _vmem_budget_and_tile_cap():
    """Generation-aware scoped-VMEM limit and batch-tile cap."""
    try:
        info = pltpu.get_tpu_info()
        vmem_capacity = int(getattr(info, "vmem_capacity_bytes", 0) or 0)
    except Exception:
        vmem_capacity = 0
    if vmem_capacity <= 0:
        vmem_capacity = 64 << 20            # conservative (v7x-sized) default
    if vmem_capacity >= (96 << 20):         # v5e / v6e: 128 MiB physical VMEM
        return 96 << 20, 512
    return 32 << 20, 256                    # v7x: 64 MiB physical VMEM


@functools.lru_cache(maxsize=None)
def _build_aqkan_call(tile_b, b_p, d_in_p, h_p, d_out_p, out_dtype,
                      vmem_limit_bytes, buffer_weights):
    batch_map = lambda i: (i, 0)
    const_map = lambda i: (0, 0)

    def weight_spec(shape):
        if buffer_weights:
            # Constant block index: one buffer is enough -> avoids doubling
            # resident-weight VMEM (matters most on v7x's 64 MiB VMEM).
            return pl.BlockSpec(shape, const_map, pipeline_mode=pl.Buffered(1))
        return pl.BlockSpec(shape, const_map)

    in_specs = [
        pl.BlockSpec((tile_b, d_in_p), batch_map),   # x: batch-tiled, pipelined
        weight_spec((d_in_p, h_p)),                  # w1  (q folded in)
        weight_spec((1, h_p)),                       # b1  (q folded in)
        weight_spec((h_p, h_p)),                     # wh
        weight_spec((1, h_p)),                       # bh
        weight_spec((h_p, d_out_p)),                 # w2
        weight_spec((1, d_out_p)),                   # b2
    ]
    return pl.pallas_call(
        aqkan_kernel,
        out_shape=jax.ShapeDtypeStruct((b_p, d_out_p), out_dtype),
        grid=(b_p // tile_b,),
        in_specs=in_specs,
        out_specs=pl.BlockSpec((tile_b, d_out_p), batch_map),
        compiler_params=pltpu.CompilerParams(
            dimension_semantics=("parallel",),
            vmem_limit_bytes=vmem_limit_bytes,
        ),
    )


def prepare_params(params):
    """One-time parameter prep (call once, reuse across forward calls).

    Folds q_transform into fc1, zero-pads feature dims to multiples of 128 and
    casts MXU operands to bf16.  Zero padding keeps the math exact: padded x
    cols hit zero w1 rows; padded hidden cols get zero bias (sin(0)=0,
    tanh(0)=0) and multiply zero rows of wh/w2; padded output cols are sliced
    off by the wrapper.
    """
    w1, b1, q, wh, bh, w2, b2 = params
    d_in, h = w1.shape
    d_out = w2.shape[1]
    d_in_p = _round_up(d_in, 128)
    h_p = _round_up(h, 128)
    d_out_p = _round_up(d_out, 128)
    bf16, f32 = jnp.bfloat16, jnp.float32

    # Fold q in f32 BEFORE the bf16 cast.
    w1q = w1.astype(f32) * q.astype(f32)          # scale columns of W1 by q
    b1q = b1.astype(f32) * q.astype(f32)

    w1p = jnp.zeros((d_in_p, h_p), bf16).at[:d_in, :h].set(w1q.astype(bf16))
    b1p = jnp.zeros((1, h_p), f32).at[:, :h].set(b1q)
    whp = jnp.zeros((h_p, h_p), bf16).at[:h, :h].set(wh.astype(bf16))
    bhp = jnp.zeros((1, h_p), f32).at[:, :h].set(bh.astype(f32))
    w2p = jnp.zeros((h_p, d_out_p), bf16).at[:h, :d_out].set(w2.astype(bf16))
    b2p = jnp.zeros((1, d_out_p), f32).at[:, :d_out].set(b2.astype(f32))

    return {
        "dims": (d_in, h, d_out),
        "padded_dims": (d_in_p, h_p, d_out_p),
        "weights": (w1p, b1p, whp, bhp, w2p, b2p),
    }


def aqkan_forward(x, prepared, *, out_dtype=jnp.bfloat16):
    """Fused AQKAN forward pass; `prepared` comes from prepare_params()."""
    d_in, _, d_out = prepared["dims"]
    d_in_p, h_p, d_out_p = prepared["padded_dims"]
    w1p, b1p, whp, bhp, w2p, b2p = prepared["weights"]

    b = x.shape[0]
    assert x.shape[1] == d_in, "input feature dim mismatch"

    vmem_limit, tile_b_cap = _vmem_budget_and_tile_cap()

    # Batch tile: minimize padded rows while respecting the per-generation cap.
    n_steps = max(1, _cdiv(b, tile_b_cap))
    tile_b = min(_round_up(_cdiv(b, n_steps), 8), _round_up(b, 8))
    b_p = _round_up(b, tile_b)

    # Resident bf16 weights (single-buffered) must fit under the VMEM limit.
    # TODO(synk): for very large hidden dims (H_p >~ 2-4K on v7x) add a K-grid
    # reduction (f32 acc scratch + pl.when init/finalize) or keep wh in HBM via
    # memory_space=pl.ANY + pltpu.emit_pipeline instead of the all-resident
    # layout; not needed at these shapes.

    bf16 = jnp.bfloat16
    if b_p == b and d_in_p == d_in:
        xp = x.astype(bf16)                        # no wrapper pad copy needed
    else:
        xp = jnp.zeros((b_p, d_in_p), bf16).at[:b, :d_in].set(x.astype(bf16))

    args = (xp, w1p, b1p, whp, bhp, w2p, b2p)
    try:
        call = _build_aqkan_call(tile_b, b_p, d_in_p, h_p, d_out_p, out_dtype,
                                 vmem_limit, True)
        out_p = call(*args)
    except Exception:
        # Fallback if pipeline_mode=pl.Buffered(1) is unsupported here.
        call = _build_aqkan_call(tile_b, b_p, d_in_p, h_p, d_out_p, out_dtype,
                                 vmem_limit, False)
        out_p = call(*args)

    if b_p == b and d_out_p == d_out:
        return out_p                               # no post-kernel slice copy
    return out_p[:b, :d_out]


def init_params(key, input_dim, hidden_dim, output_dim):
    """Deterministic parameter init mirroring the nn.Module's shapes.

    torch.nn.Linear(in, out) has weight (out, in) and bias (out,);
    we store the transpose (in, out) and biases as (1, out).
    q_transform ~ randn(hidden_dim).
    """
    k1, k2, k3, k4, k5, k6, k7 = jax.random.split(key, 7)
    lim1 = 1.0 / jnp.sqrt(input_dim)
    limh = 1.0 / jnp.sqrt(hidden_dim)

    w1 = jax.random.uniform(k1, (input_dim, hidden_dim), jnp.float32, -lim1, lim1)
    b1 = jax.random.uniform(k2, (1, hidden_dim), jnp.float32, -lim1, lim1)
    q = jax.random.normal(k3, (1, hidden_dim), jnp.float32)
    wh = jax.random.uniform(k4, (hidden_dim, hidden_dim), jnp.float32, -limh, limh)
    bh = jax.random.uniform(k5, (1, hidden_dim), jnp.float32, -limh, limh)
    w2 = jax.random.uniform(k6, (hidden_dim, output_dim), jnp.float32, -limh, limh)
    b2 = jax.random.uniform(k7, (1, output_dim), jnp.float32, -limh, limh)
    return (w1, b1, q, wh, bh, w2, b2)


def aqkan_reference_matched(x, params):
    """Plain-JAX reference with the SAME numerics as the kernel:
    q folded into fc1 in f32, bf16 MXU operands, f32 accumulation/activations,
    bf16 output."""
    w1, b1, q, wh, bh, w2, b2 = params
    bf16 = jnp.bfloat16
    w1q = (w1 * q).astype(bf16)
    b1q = b1 * q
    h = jnp.dot(x.astype(bf16), w1q, preferred_element_type=jnp.float32) + b1q
    h = jnp.sin(h)
    h = jnp.dot(h.astype(bf16), wh.astype(bf16),
                preferred_element_type=jnp.float32) + bh
    h = jnp.tanh(h)
    out = jnp.dot(h.astype(bf16), w2.astype(bf16),
                  preferred_element_type=jnp.float32) + b2
    return out.astype(bf16)


def aqkan_reference_f32(x, params):
    """Full-precision reference of the module's forward."""
    w1, b1, q, wh, bh, w2, b2 = params
    h = x @ w1 + b1
    h = jnp.sin(h * q)
    h = h @ wh + bh
    h = jnp.tanh(h)
    return h @ w2 + b2


if __name__ == "__main__":
    # Small shapes consistent with the module's forward:
    # x: (batch, input_dim) -> (batch, output_dim)
    batch, input_dim, hidden_dim, output_dim = 8, 16, 32, 8

    key = jax.random.PRNGKey(0)
    kx, kp = jax.random.split(key)
    x = jax.random.normal(kx, (batch, input_dim), jnp.float32)
    params = init_params(kp, input_dim, hidden_dim, output_dim)

    # TODO(synk): QuantumInspiredCell grid ops (hadamard/pauli/entangle/measure)
    # are not used in forward(), so they are intentionally not implemented.

    prepared = prepare_params(params)          # one-time weight prep (hoisted)
    out = aqkan_forward(x, prepared)
    out = jax.block_until_ready(out)
    assert out.shape == (batch, output_dim)

    # Numerics-matched reference (q-fold, bf16 MXU operands, bf16 output).
    ref_m = aqkan_reference_matched(x, params)
    assert jnp.allclose(out.astype(jnp.float32), ref_m.astype(jnp.float32),
                        atol=1e-2, rtol=1e-2)

    # Loose sanity check against the pure-f32 module semantics.
    ref_f32 = aqkan_reference_f32(x, params)
    assert jnp.allclose(out.astype(jnp.float32), ref_f32, atol=1e-1, rtol=1e-1)

    print("KERNEL_OK")
</pallas_src>

<mosaic_0001>
module attributes {stable_mosaic.version = 11 : i64} {
  func.func @aqkan_kernel(%arg0: i32, %arg1: memref<8x128xbf16, #tpu.memory_space<vmem>>, %arg2: memref<128x128xbf16, #tpu.memory_space<vmem>>, %arg3: memref<1x128xf32, #tpu.memory_space<vmem>>, %arg4: memref<128x128xbf16, #tpu.memory_space<vmem>>, %arg5: memref<1x128xf32, #tpu.memory_space<vmem>>, %arg6: memref<128x128xbf16, #tpu.memory_space<vmem>>, %arg7: memref<1x128xf32, #tpu.memory_space<vmem>>, %arg8: memref<8x128xbf16, #tpu.memory_space<vmem>>) attributes {dimension_semantics = [#tpu.dimension_semantics<parallel>], iteration_bounds = array<i64: 1>, scalar_prefetch = 0 : i64, scratch_operands = 0 : i64, tpu.core_type = #tpu.core_type<tc>, window_params = [{transform_indices = @transform_0, window_bounds = array<i64: 8, 128>}, {pipeline_mode = #tpu.pipeline_mode<synchronous>, transform_indices = @transform_1, window_bounds = array<i64: 128, 128>}, {pipeline_mode = #tpu.pipeline_mode<synchronous>, transform_indices = @transform_2, window_bounds = array<i64: 1, 128>}, {pipeline_mode = #tpu.pipeline_mode<synchronous>, transform_indices = @transform_3, window_bounds = array<i64: 128, 128>}, {pipeline_mode = #tpu.pipeline_mode<synchronous>, transform_indices = @transform_4, window_bounds = array<i64: 1, 128>}, {pipeline_mode = #tpu.pipeline_mode<synchronous>, transform_indices = @transform_5, window_bounds = array<i64: 128, 128>}, {pipeline_mode = #tpu.pipeline_mode<synchronous>, transform_indices = @transform_6, window_bounds = array<i64: 1, 128>}, {transform_indices = @transform_7, window_bounds = array<i64: 8, 128>}]} {
    %c0 = arith.constant 0 : index
    %c0_0 = arith.constant 0 : index
    %0 = vector.load %arg1[%c0, %c0_0] : memref<8x128xbf16, #tpu.memory_space<vmem>>, vector<8x128xbf16>
    %c0_1 = arith.constant 0 : index
    %c0_2 = arith.constant 0 : index
    %1 = vector.load %arg2[%c0_1, %c0_2] : memref<128x128xbf16, #tpu.memory_space<vmem>>, vector<128x128xbf16>
    %cst = arith.constant dense<0.000000e+00> : vector<8x128xf32>
    %2 = tpu.matmul %0, %1, %cst {dimension_numbers = #tpu.dot_dimension_numbers<[1], [0], [0], [1], [0, 0, 1, 1], [], []>} : vector<8x128xbf16>, vector<128x128xbf16>, vector<8x128xf32> -> vector<8x128xf32>
    %c0_3 = arith.constant 0 : index
    %c0_4 = arith.constant 0 : index
    %3 = vector.load %arg3[%c0_3, %c0_4] : memref<1x128xf32, #tpu.memory_space<vmem>>, vector<1x128xf32>
    %4 = vector.broadcast %3 : vector<1x128xf32> to vector<8x128xf32>
    %5 = arith.addf %2, %4 : vector<8x128xf32>
    %6 = math.sin %5 : vector<8x128xf32>
    %7 = arith.truncf %6 : vector<8x128xf32> to vector<8x128xbf16>
    %c0_5 = arith.constant 0 : index
    %c0_6 = arith.constant 0 : index
    %8 = vector.load %arg4[%c0_5, %c0_6] : memref<128x128xbf16, #tpu.memory_space<vmem>>, vector<128x128xbf16>
    %cst_7 = arith.constant dense<0.000000e+00> : vector<8x128xf32>
    %9 = tpu.matmul %7, %8, %cst_7 {dimension_numbers = #tpu.dot_dimension_numbers<[1], [0], [0], [1], [0, 0, 1, 1], [], []>} : vector<8x128xbf16>, vector<128x128xbf16>, vector<8x128xf32> -> vector<8x128xf32>
    %c0_8 = arith.constant 0 : index
    %c0_9 = arith.constant 0 : index
    %10 = vector.load %arg5[%c0_8, %c0_9] : memref<1x128xf32, #tpu.memory_space<vmem>>, vector<1x128xf32>
    %11 = vector.broadcast %10 : vector<1x128xf32> to vector<8x128xf32>
    %12 = arith.addf %9, %11 : vector<8x128xf32>
    %13 = math.tanh %12 : vector<8x128xf32>
    %14 = arith.truncf %13 : vector<8x128xf32> to vector<8x128xbf16>
    %c0_10 = arith.constant 0 : index
    %c0_11 = arith.constant 0 : index
    %15 = vector.load %arg6[%c0_10, %c0_11] : memref<128x128xbf16, #tpu.memory_space<vmem>>, vector<128x128xbf16>
    %cst_12 = arith.constant dense<0.000000e+00> : vector<8x128xf32>
    %16 = tpu.matmul %14, %15, %cst_12 {dimension_numbers = #tpu.dot_dimension_numbers<[1], [0], [0], [1], [0, 0, 1, 1], [], []>} : vector<8x128xbf16>, vector<128x128xbf16>, vector<8x128xf32> -> vector<8x128xf32>
    %c0_13 = arith.constant 0 : index
    %c0_14 = arith.constant 0 : index
    %17 = vector.load %arg7[%c0_13, %c0_14] : memref<1x128xf32, #tpu.memory_space<vmem>>, vector<1x128xf32>
    %18 = vector.broadcast %17 : vector<1x128xf32> to vector<8x128xf32>
    %19 = arith.addf %16, %18 : vector<8x128xf32>
    %20 = arith.truncf %19 : vector<8x128xf32> to vector<8x128xbf16>
    %c0_15 = arith.constant 0 : index
    %c0_16 = arith.constant 0 : index
    %21 = vector.load %arg8[%c0_15, %c0_16] : memref<8x128xbf16, #tpu.memory_space<vmem>>, vector<8x128xbf16>
    tpu.vector_store %arg8[%c0_15, %c0_16], %20 {strides = array<i32>} : memref<8x128xbf16, #tpu.memory_space<vmem>>, vector<8x128xbf16>,
    return
  }
  func.func @transform_0(%arg0: i32) -> (i32, i32) {
    %c0_i32 = arith.constant 0 : i32
    %c0_i32_0 = arith.constant 0 : i32
    return %arg0, %c0_i32 : i32, i32
  }
  func.func @transform_1(%arg0: i32) -> (i32, i32) {
    %c0_i32 = arith.constant 0 : i32
    %c0_i32_0 = arith.constant 0 : i32
    %c0_i32_1 = arith.constant 0 : i32
    return %c0_i32, %c0_i32_0 : i32, i32
  }
  func.func @transform_2(%arg0: i32) -> (i32, i32) {
    %c0_i32 = arith.constant 0 : i32
    %c0_i32_0 = arith.constant 0 : i32
    %c0_i32_1 = arith.constant 0 : i32
    return %c0_i32, %c0_i32_0 : i32, i32
  }
  func.func @transform_3(%arg0: i32) -> (i32, i32) {
    %c0_i32 = arith.constant 0 : i32
    %c0_i32_0 = arith.constant 0 : i32
    %c0_i32_1 = arith.constant 0 : i32
    return %c0_i32, %c0_i32_0 : i32, i32
  }
  func.func @transform_4(%arg0: i32) -> (i32, i32) {
    %c0_i32 = arith.constant 0 : i32
    %c0_i32_0 = arith.constant 0 : i32
    %c0_i32_1 = arith.constant 0 : i32
    return %c0_i32, %c0_i32_0 : i32, i32
  }
  func.func @transform_5(%arg0: i32) -> (i32, i32) {
    %c0_i32 = arith.constant 0 : i32
    %c0_i32_0 = arith.constant 0 : i32
    %c0_i32_1 = arith.constant 0 : i32
    return %c0_i32, %c0_i32_0 : i32, i32
  }
  func.func @transform_6(%arg0: i32) -> (i32, i32) {
    %c0_i32 = arith.constant 0 : i32
    %c0_i32_0 = arith.constant 0 : i32
    %c0_i32_1 = arith.constant 0 : i32
    return %c0_i32, %c0_i32_0 : i32, i32
  }
  func.func @transform_7(%arg0: i32) -> (i32, i32) {
    %c0_i32 = arith.constant 0 : i32
    %c0_i32_0 = arith.constant 0 : i32
    return %arg0, %c0_i32 : i32, i32
  }
}

module attributes {stable_mosaic.version = 11 : i64} {
  func.func @aqkan_kernel(%arg0: i32, %arg1: memref<8x128xbf16, #tpu.memory_space<vmem>>, %arg2: memref<128x128xbf16, #tpu.memory_space<vmem>>, %arg3: memref<1x128xf32, #tpu.memory_space<vmem>>, %arg4: memref<128x128xbf16, #tpu.memory_space<vmem>>, %arg5: memref<1x128xf32, #tpu.memory_space<vmem>>, %arg6: memref<128x128xbf16, #tpu.memory_space<vmem>>, %arg7: memref<1x128xf32, #tpu.memory_space<vmem>>, %arg8: memref<8x128xbf16, #tpu.memory_space<vmem>>) attributes {dimension_semantics = [#tpu.dimension_semantics<parallel>], iteration_bounds = array<i64: 1>, scalar_prefetch = 0 : i64, scratch_operands = 0 : i64, tpu.core_type = #tpu.core_type<tc>, window_params = [{transform_indices = @transform_0, window_bounds = array<i64: 8, 128>}, {pipeline_mode = #tpu.pipeline_mode<synchronous>, transform_indices = @transform_1, window_bounds = array<i64: 128, 128>}, {pipeline_mode = #tpu.pipeline_mode<synchronous>, transform_indices = @transform_2, window_bounds = array<i64: 1, 128>}, {pipeline_mode = #tpu.pipeline_mode<synchronous>, transform_indices = @transform_3, window_bounds = array<i64: 128, 128>}, {pipeline_mode = #tpu.pipeline_mode<synchronous>, transform_indices = @transform_4, window_bounds = array<i64: 1, 128>}, {pipeline_mode = #tpu.pipeline_mode<synchronous>, transform_indices = @transform_5, window_bounds = array<i64: 128, 128>}, {pipeline_mode = #tpu.pipeline_mode<synchronous>, transform_indices = @transform_6, window_bounds = array<i64: 1, 128>}, {transform_indices = @transform_7, window_bounds = array<i64: 8, 128>}]} {
    %c0 = arith.constant 0 : index
    %c0_0 = arith.constant 0 : index
    %0 = vector.load %arg1[%c0, %c0_0] : memref<8x128xbf16, #tpu.memory_space<vmem>>, vector<8x128xbf16>
    %c0_1 = arith.constant 0 : index
    %c0_2 = arith.constant 0 : index
    %1 = vector.load %arg2[%c0_1, %c0_2] : memref<128x128xbf16, #tpu.memory_space<vmem>>, vector<128x128xbf16>
    %cst = arith.constant dense<0.000000e+00> : vector<8x128xf32>
    %2 = tpu.matmul %0, %1, %cst {dimension_numbers = #tpu.dot_dimension_numbers<[1], [0], [0], [1], [0, 0, 1, 1], [], []>} : vector<8x128xbf16>, vector<128x128xbf16>, vector<8x128xf32> -> vector<8x128xf32>
    %c0_3 = arith.constant 0 : index
    %c0_4 = arith.constant 0 : index
    %3 = vector.load %arg3[%c0_3, %c0_4] : memref<1x128xf32, #tpu.memory_space<vmem>>, vector<1x128xf32>
    %4 = vector.broadcast %3 : vector<1x128xf32> to vector<8x128xf32>
    %5 = arith.addf %2, %4 : vector<8x128xf32>
    %6 = math.sin %5 : vector<8x128xf32>
    %7 = arith.truncf %6 : vector<8x128xf32> to vector<8x128xbf16>
    %c0_5 = arith.constant 0 : index
    %c0_6 = arith.constant 0 : index
    %8 = vector.load %arg4[%c0_5, %c0_6] : memref<128x128xbf16, #tpu.memory_space<vmem>>, vector<128x128xbf16>
    %cst_7 = arith.constant dense<0.000000e+00> : vector<8x128xf32>
    %9 = tpu.matmul %7, %8, %cst_7 {dimension_numbers = #tpu.dot_dimension_numbers<[1], [0], [0], [1], [0, 0, 1, 1], [], []>} : vector<8x128xbf16>, vector<128x128xbf16>, vector<8x128xf32> -> vector<8x128xf32>
    %c0_8 = arith.constant 0 : index
    %c0_9 = arith.constant 0 : index
    %10 = vector.load %arg5[%c0_8, %c0_9] : memref<1x128xf32, #tpu.memory_space<vmem>>, vector<1x128xf32>
    %11 = vector.broadcast %10 : vector<1x128xf32> to vector<8x128xf32>
    %12 = arith.addf %9, %11 : vector<8x128xf32>
    %13 = math.tanh %12 : vector<8x128xf32>
    %14 = arith.truncf %13 : vector<8x128xf32> to vector<8x128xbf16>
    %c0_10 = arith.constant 0 : index
    %c0_11 = arith.constant 0 : index
    %15 = vector.load %arg6[%c0_10, %c0_11] : memref<128x128xbf16, #tpu.memory_space<vmem>>, vector<128x128xbf16>
    %cst_12 = arith.constant dense<0.000000e+00> : vector<8x128xf32>
    %16 = tpu.matmul %14, %15, %cst_12 {dimension_numbers = #tpu.dot_dimension_numbers<[1], [0], [0], [1], [0, 0, 1, 1], [], []>} : vector<8x128xbf16>, vector<128x128xbf16>, vector<8x128xf32> -> vector<8x128xf32>
    %c0_13 = arith.constant 0 : index
    %c0_14 = arith.constant 0 : index
    %17 = vector.load %arg7[%c0_13, %c0_14] : memref<1x128xf32, #tpu.memory_space<vmem>>, vector<1x128xf32>
    %18 = vector.broadcast %17 : vector<1x128xf32> to vector<8x128xf32>
    %19 = arith.addf %16, %18 : vector<8x128xf32>
    %20 = arith.truncf %19 : vector<8x128xf32> to vector<8x128xbf16>
    %c0_15 = arith.constant 0 : index
    %c0_16 = arith.constant 0 : index
    %21 = vector.load %arg8[%c0_15, %c0_16] : memref<8x128xbf16, #tpu.memory_space<vmem>>, vector<8x128xbf16>
    tpu.vector_store %arg8[%c0_15, %c0_16], %20 {strides = array<i32>} : memref<8x128xbf16, #tpu.memory_space<vmem>>, vector<8x128xbf16>,
    return
  }
  func.func @transform_0(%arg0: i32) -> (i32, i32) {
    %c0_i32 = arith.constant 0 : i32
    %c0_i32_0 = arith.constant 0 : i32
    return %arg0, %c0_i32 : i32, i32
  }
  func.func @transform_1(%arg0: i32) -> (i32, i32) {
    %c0_i32 = arith.constant 0 : i32
    %c0_i32_0 = arith.constant 0 : i32
    %c0_i32_1 = arith.constant 0 : i32
    return %c0_i32, %c0_i32_0 : i32, i32
  }
  func.func @transform_2(%arg0: i32) -> (i32, i32) {
    %c0_i32 = arith.constant 0 : i32
    %c0_i32_0 = arith.constant 0 : i32
    %c0_i32_1 = arith.constant 0 : i32
    return %c0_i32, %c0_i32_0 : i32, i32
  }
  func.func @transform_3(%arg0: i32) -> (i32, i32) {
    %c0_i32 = arith.constant 0 : i32
    %c0_i32_0 = arith.constant 0 : i32
    %c0_i32_1 = arith.constant 0 : i32
    return %c0_i32, %c0_i32_0 : i32, i32
  }
  func.func @transform_4(%arg0: i32) -> (i32, i32) {
    %c0_i32 = arith.constant 0 : i32
    %c0_i32_0 = arith.constant 0 : i32
    %c0_i32_1 = arith.constant 0 : i32
    return %c0_i32, %c0_i32_0 : i32, i32
  }
  func.func @transform_5(%arg0: i32) -> (i32, i32) {
    %c0_i32 = arith.constant 0 : i32
    %c0_i32_0 = arith.constant 0 : i32
    %c0_i32_1 = arith.constant 0 : i32
    return %c0_i32, %c0_i32_0 : i32, i32
  }
  func.func @transform_6(%arg0: i32) -> (i32, i32) {
    %c0_i32 = arith.constant 0 : i32
    %c0_i32_0 = arith.constant 0 : i32
    %c0_i32_1 = arith.constant 0 : i32
    return %c0_i32, %c0_i32_0 : i32, i32
  }
  func.func @transform_7(%arg0: i32) -> (i32, i32) {
    %c0_i32 = arith.constant 0 : i32
    %c0_i32_0 = arith.constant 0 : i32
    return %arg0, %c0_i32 : i32, i32
  }
}

</mosaic_0001>

<llo_original>
// kernel: tpu_custom_call.1
$region0: #{tpu_custom_call.1}
  #allocation0 [shape = 'u32[]', space=smem, size = 0x4, offset = 0x4, fixed_abs, tag = 'smem constant byte address 0x4 - core index']
  #allocation1 [shape = 'u32[144,128]{1,0:T(1,128)}', space=vmem, size = 0x12000, scoped, tag = 'internal scratch']
  %s0 = inlined_call_operand.hbm [shape: bf16[8,128], index: 0, kind: input, shape index: {}]
  %s1 = inlined_call_operand.hbm [shape: bf16[128,128], index: 1, kind: input, shape index: {}]
  %s2 = inlined_call_operand.vmem [shape: f32[1,128], index: 2, kind: input, shape index: {}]
  %s3 = inlined_call_operand.hbm [shape: bf16[128,128], index: 3, kind: input, shape index: {}]
  %s4 = inlined_call_operand.vmem [shape: f32[1,128], index: 4, kind: input, shape index: {}]
  %s5 = inlined_call_operand.hbm [shape: bf16[128,128], index: 5, kind: input, shape index: {}]
  %s6 = inlined_call_operand.vmem [shape: f32[1,128], index: 6, kind: input, shape index: {}]
  %s7 = inlined_call_operand.hbm [shape: bf16[8,128], index: 7, kind: output, shape index: {}]
  %s8 = sld [smem:[#allocation0]]
  $region54: #{tpu_custom_call.1} parent=0
    _
  %s10 = ssub.s32 1, %s8
  %s11 = scalar_select 0, %s10, %s8
  $region1: #{tpu_custom_call.1} parent=0
    #allocation2 [shape = 'u8[2048]{0}', space=vmem, size = 0x800, scoped, tag = 'input window, operand 0, single buffered']
    #allocation3 [shape = 's32[1]{0}', space=sflag, size = 0x4, scoped, tag = 'scoped memory for tpu_custom_call.1']
    #allocation4 [shape = 's32[1]{0}', space=sflag, size = 0x4, scoped, tag = 'scoped memory for tpu_custom_call.1']
    #allocation5 [shape = 'u8[32768]{0}', space=vmem, size = 0x8000, scoped, tag = 'input window, operand 1, single buffered']
    #allocation6 [shape = 's32[1]{0}', space=sflag, size = 0x4, scoped, tag = 'scoped memory for tpu_custom_call.1']
    #allocation7 [shape = 'u8[32768]{0}', space=vmem, size = 0x8000, scoped, tag = 'input window, operand 3, single buffered']
    #allocation8 [shape = 'u8[32768]{0}', space=vmem, size = 0x8000, scoped, tag = 'input window, operand 5, single buffered']
    #allocation9 [shape = 's32[1]{0}', space=sflag, size = 0x4, scoped, tag = 'scoped memory for tpu_custom_call.1']
    #allocation10 [shape = 'u8[2048]{0}', space=vmem, size = 0x800, scoped, tag = 'output window, operand 0, single buffered']
    %12 = vsyncpa [#allocation3], 0
    %13 = vsyncpa [#allocation6], 0
    %14 = vsyncpa [#allocation9], 0
    %15 = vsyncpa [#allocation4], 0
    // Predicated region
    $region2: #{tpu_custom_call.1} parent=1 // pred_check
      _
    $region3: #{tpu_custom_call.1} parent=1 // pred_check_branch
      %17 = sbr.rel (0) target = $region5
    $region4: #{tpu_custom_call.1} parent=1 // pred_region
      %s19 = ssub.s32 64, 64
      %20 = vsyncadd [#allocation3], %s19
      %s22 = sshll.u32 [#allocation2], 4
      %s23 = int_to_ptr.vmem [resolvable:$true] %s22
      %25 = dma.hbm_to_vmem [thread:$0]  %s0, 64, %s23, [#allocation3]
    $region5: #{tpu_custom_call.1} parent=1 // pred_fallthru
      _
    // Predicated region
    $region6: #{tpu_custom_call.1} parent=1 // pred_check
      _
    $region7: #{tpu_custom_call.1} parent=1 // pred_check_branch
      %27 = sbr.rel (0) target = $region9
    $region8: #{tpu_custom_call.1} parent=1 // pred_region
      %s29 = ssub.s32 1024, 1024
      %30 = vsyncadd [#allocation6], %s29
      %s31 = sshll.u32 [#allocation5], 4
      %s32 = int_to_ptr.vmem [resolvable:$true] %s31
      %37 = dma.hbm_to_vmem [thread:$0]  %s1, 1024, %s32, [#allocation6], 64, 64, 4
    $region9: #{tpu_custom_call.1} parent=1 // pred_fallthru
      _
    // Predicated region
    $region10: #{tpu_custom_call.1} parent=1 // pred_check
      _
    $region11: #{tpu_custom_call.1} parent=1 // pred_check_branch
      %39 = sbr.rel (0) target = $region13
    $region12: #{tpu_custom_call.1} parent=1 // pred_region
      _
    $region13: #{tpu_custom_call.1} parent=1 // pred_fallthru
      _
    // Predicated region
    $region14: #{tpu_custom_call.1} parent=1 // pred_check
      _
    $region15: #{tpu_custom_call.1} parent=1 // pred_check_branch
      %41 = sbr.rel (0) target = $region17
    $region16: #{tpu_custom_call.1} parent=1 // pred_region
      %s43 = ssub.s32 1024, 1024
      %44 = vsyncadd [#allocation6], %s43
      %s45 = sshll.u32 [#allocation7], 4
      %s46 = int_to_ptr.vmem [resolvable:$true] %s45
      %51 = dma.hbm_to_vmem [thread:$0]  %s3, 1024, %s46, [#allocation6], 64, 64, 4
    $region17: #{tpu_custom_call.1} parent=1 // pred_fallthru
      _
    // Predicated region
    $region18: #{tpu_custom_call.1} parent=1 // pred_check
      _
    $region19: #{tpu_custom_call.1} parent=1 // pred_check_branch
      %53 = sbr.rel (0) target = $region21
    $region20: #{tpu_custom_call.1} parent=1 // pred_region
      _
    $region21: #{tpu_custom_call.1} parent=1 // pred_fallthru
      _
    // Predicated region
    $region22: #{tpu_custom_call.1} parent=1 // pred_check
      _
    $region23: #{tpu_custom_call.1} parent=1 // pred_check_branch
      %55 = sbr.rel (0) target = $region25
    $region24: #{tpu_custom_call.1} parent=1 // pred_region
      %s57 = ssub.s32 1024, 1024
      %58 = vsyncadd [#allocation9], %s57
      %s59 = sshll.u32 [#allocation8], 4
      %s60 = int_to_ptr.vmem [resolvable:$true] %s59
      %65 = dma.hbm_to_vmem [thread:$0]  %s5, 1024, %s60, [#allocation9], 64, 64, 4
    $region25: #{tpu_custom_call.1} parent=1 // pred_fallthru
      _
    // Predicated region
    $region26: #{tpu_custom_call.1} parent=1 // pred_check
      _
    $region27: #{tpu_custom_call.1} parent=1 // pred_check_branch
      %67 = sbr.rel (0) target = $region29
    $region28: #{tpu_custom_call.1} parent=1 // pred_region
      _
    $region29: #{tpu_custom_call.1} parent=1 // pred_fallthru
      _
    // Predicated region
    $region30: #{tpu_custom_call.1} parent=1 // pred_check
      _
    $region31: #{tpu_custom_call.1} parent=1 // pred_check_branch
      %69 = sbr.rel (0) target = $region33
    $region32: #{tpu_custom_call.1} parent=1 // pred_region
      %70 = dma.done [#allocation3], 64
    $region33: #{tpu_custom_call.1} parent=1 // pred_fallthru
      _
    // Predicated region
    $region34: #{tpu_custom_call.1} parent=1 // pred_check
      _
    $region35: #{tpu_custom_call.1} parent=1 // pred_check_branch
      %72 = sbr.rel (0) target = $region37
    $region36: #{tpu_custom_call.1} parent=1 // pred_region
      %73 = dma.done [#allocation6], 1024
    $region37: #{tpu_custom_call.1} parent=1 // pred_fallthru
      _
    // Predicated region
    $region38: #{tpu_custom_call.1} parent=1 // pred_check
      _
    $region39: #{tpu_custom_call.1} parent=1 // pred_check_branch
      %75 = sbr.rel (0) target = $region41
    $region40: #{tpu_custom_call.1} parent=1 // pred_region
      %76 = dma.done [#allocation6], 1024
    $region41: #{tpu_custom_call.1} parent=1 // pred_fallthru
      _
    // Predicated region
    $region42: #{tpu_custom_call.1} parent=1 // pred_check
      _
    $region43: #{tpu_custom_call.1} parent=1 // pred_check_branch
      %78 = sbr.rel (0) target = $region45
    $region44: #{tpu_custom_call.1} parent=1 // pred_region
      %79 = dma.done [#allocation9], 1024
    $region45: #{tpu_custom_call.1} parent=1 // pred_fallthru
      _
    %v81 = vld [vmem:[#allocation2] sm:$0xf]
    %v82 = vld [vmem:[#allocation5] sm:$0xf]
    %v83 = vld [vmem:[#allocation5 + $0x4] sm:$0xf]
    %v84 = vld [vmem:[#allocation5 + $0x8] sm:$0xf]
    %v85 = vld [vmem:[#allocation5 + $0xc] sm:$0xf]
    %v86 = vld [vmem:[#allocation5 + $0x10] sm:$0xf]
    %v87 = vld [vmem:[#allocation5 + $0x14] sm:$0xf]
    %v88 = vld [vmem:[#allocation5 + $0x18] sm:$0xf]
    %v89 = vld [vmem:[#allocation5 + $0x1c] sm:$0xf]
    %v90 = vld [vmem:[#allocation5 + $0x20] sm:$0xf]
    %v91 = vld [vmem:[#allocation5 + $0x24] sm:$0xf]
    %v92 = vld [vmem:[#allocation5 + $0x28] sm:$0xf]
    %v93 = vld [vmem:[#allocation5 + $0x2c] sm:$0xf]
    %v94 = vld [vmem:[#allocation5 + $0x30] sm:$0xf]
    %v95 = vld [vmem:[#allocation5 + $0x34] sm:$0xf]
    %v96 = vld [vmem:[#allocation5 + $0x38] sm:$0xf]
    %v97 = vld [vmem:[#allocation5 + $0x3c] sm:$0xf]
    %v98 = vld [vmem:[%s2] sm:$0x1]
    %v100 = vlaneseq
    %v101 = vshrl.u32 %v100, 7
    %v102 = vsub.s32 0, %v101
    %v103 = vrot.slane %v98, %v102
    %v121 = vunpack.c.l.b16 %v82
    %v122 = vunpack.c.l.b16 %v83
    %v123 = vunpack.c.l.b16 %v84
    %v124 = vunpack.c.l.b16 %v85
    %v125 = vunpack.c.l.b16 %v86
    %v126 = vunpack.c.l.b16 %v87
    %v127 = vunpack.c.l.b16 %v88
    %v128 = vunpack.c.l.b16 %v89
    %v129 = vunpack.c.l.b16 %v90
    %v130 = vunpack.c.l.b16 %v91
    %v131 = vunpack.c.l.b16 %v92
    %v132 = vunpack.c.l.b16 %v93
    %v133 = vunpack.c.l.b16 %v94
    %v134 = vunpack.c.l.b16 %v95
    %v135 = vunpack.c.l.b16 %v96
    %v136 = vunpack.c.l.b16 %v97
    %v137 = vpack.c.b16 %v122, %v121
    %v138 = vpack.c.b16 %v124, %v123
    %v139 = vpack.c.b16 %v126, %v125
    %v140 = vpack.c.b16 %v128, %v127
    %v141 = vpack.c.b16 %v130, %v129
    %v142 = vpack.c.b16 %v132, %v131
    %v143 = vpack.c.b16 %v134, %v133
    %v144 = vpack.c.b16 %v136, %v135
    %153 = vmatprep.subr.bf16.mxu0 0
    %154 = vmatpush1.bf16.msra.mxu0 %v137
    %155 = vmatprep.subr.bf16.mxu0 0
    %156 = vmatpush1.bf16.msra.mxu0 %v138
    %157 = vmatprep.subr.bf16.mxu0 0
    %158 = vmatpush1.bf16.msra.mxu0 %v139
    %159 = vmatprep.subr.bf16.mxu0 0
    %160 = vmatpush1.bf16.msra.mxu0 %v140
    %161 = vmatprep.subr.bf16.mxu0 0
    %162 = vmatpush1.bf16.msra.mxu0 %v141
    %163 = vmatprep.subr.bf16.mxu0 0
    %164 = vmatpush1.bf16.msra.mxu0 %v142
    %165 = vmatprep.subr.bf16.mxu0 0
    %166 = vmatpush1.bf16.msra.mxu0 %v143
    %167 = vmatprep.subr.bf16.mxu0 0
    %168 = vmatpush1.bf16.msra.mxu0 %v144
    %169 = vmatprep.subr.bf16.mxu0 0
    %170 = vmatpush1.bf16.msra.mxu0 0
    %171 = vmatprep.subr.bf16.mxu0 0
    %172 = vmatpush1.bf16.msra.mxu0 0
    %173 = vmatprep.subr.bf16.mxu0 0
    %174 = vmatpush1.bf16.msra.mxu0 0
    %175 = vmatprep.subr.bf16.mxu0 0
    %176 = vmatpush1.bf16.msra.mxu0 0
    %177 = vmatprep.subr.bf16.mxu0 0
    %178 = vmatpush1.bf16.msra.mxu0 0
    %179 = vmatprep.subr.bf16.mxu0 0
    %180 = vmatpush1.bf16.msra.mxu0 0
    %181 = vmatprep.subr.bf16.mxu0 0
    %182 = vmatpush1.bf16.msra.mxu0 0
    %183 = vmatprep.subr.bf16.mxu0 0
    %184 = vmatpush1.bf16.msra.mxu0 0
    %185 = vmatprep.mubr.bf16.mxu0 0
    %186 = vmatmul.mubr.bf16.gmra.mrb[0].mxu0 %v81
    %v187 = vpop.f32.mrb[0].mxu0
    %v188 = vadd.f32 %v103, %v187
    %v189 = vpop.f32.mrb[0].mxu0
    %v190 = vpop.f32.mrb[0].mxu0
    %v191 = vpop.f32.mrb[0].mxu0
    %192 = vdwg.mxu0
    %v193 = vand.u32 2147483647, %v188
    %vm194 = vcmp.le.f32.partialorder %v193, 0.7853982
    %vm195 = vcmp.lt.s32.totalorder %v188, 0
    %v196 = vand.u32 %v188, 2139095040
    %v197 = vshrl.u32 %v196, 23
    %v198 = vsub.s32 %v197, 127
    %v199 = vand.u32 2147483647, %v188
    %v200 = vand.u32 %v199, 8388607
    %v201 = vor.u32 %v200, 8388608
    %v202 = vsub.s32 0, %v201
    %v203 = vadd.s32 %v198, 1
    %vm204 = vcmp.gt.s32.totalorder %v203, 0
    %v205 = vsel %vm204, %v203, 0
    %v206 = vshrl.u32 %v205, 5
    %v207 = vand.u32 %v205, 31
    %v208 = vsub.s32 32, %v207
    %v209 = vshrl.u32 683565275, %v208
    %v210 = vshll.u32 683565275, %v207
    %v211 = vshrl.u32 2475754826, %v208
    %v212 = vor.u32 %v210, %v211
    %v213 = vshll.u32 2475754826, %v207
    %v214 = vshrl.u32 2131351028, %v208
    %v215 = vor.u32 %v213, %v214
    %v216 = vshll.u32 2131351028, %v207
    %v217 = vshrl.u32 2102212464, %v208
    %v218 = vor.u32 %v216, %v217
    %v219 = vshll.u32 2102212464, %v207
    %v220 = vshrl.u32 920167782, %v208
    %v221 = vor.u32 %v219, %v220
    %v222 = vshll.u32 920167782, %v207
    %v223 = vshrl.u32 1326507024, %v208
    %v224 = vor.u32 %v222, %v223
    %vm225 = vcmp.lt.s32.totalorder %v206, 1
    %vm226 = vcmp.lt.s32.totalorder %v206, 2
    %vm227 = vcmp.lt.s32.totalorder %v206, 3
    %vm228 = vcmp.lt.s32.totalorder %v206, 4
    %v229 = vsel %vm225, %v209, %v212
    %v230 = vsel %vm228, %v218, 2102212464
    %v231 = vsel %vm227, %v215, %v230
    %v232 = vsel %vm226, %v229, %v231
    %v233 = vsel %vm225, %v212, %v215
    %v234 = vsel %vm228, %v221, 920167782
    %v235 = vsel %vm227, %v218, %v234
    %v236 = vsel %vm226, %v233, %v235
    %v237 = vsel %vm225, %v215, %v218
    %v238 = vsel %vm228, %v224, 1326507024
    %v239 = vsel %vm227, %v221, %v238
    %v240 = vsel %vm226, %v237, %v239
    %v241 = vshll.u32 %v201, 8
    %v242 = vmul.u32.u64.compose %v241, %v240
    %v243 = vextract.low.u32 %v242
    %v244 = vextract.high.u32 %v242
    %v245 = vmul.u32.u64.compose %v241, %v236
    %v246 = vextract.low.u32 %v245
    %v247 = vextract.high.u32 %v245
    %v248 = vmul.u32 %v241, %v232
    %v249 = vadd.s32 %v244, %v246
    %vm250 = vc.u32 %v244, %v246
    %v251 = vadd.s32 %v247, 1
    %v252 = vsel %vm250, %v251, %v247
    %v253 = vadd.s32 %v248, %v252
    %v254 = vadd.s32 %v253, 536870912
    %v255 = vshrl.u32 %v254, 30
    %v256 = vshll.u32 %v255, 30
    %v257 = vsub.s32 %v253, %v256
    %vm258 = vcmp.lt.s32.totalorder %v257, 0
    %v259 = vsub.s32 0, %v257
    %v260 = vsel %vm258, %v259, %v257
    %v261 = vclz %v260
    %v262 = vsub.s32 %v261, 2
    %vm263 = vcmp.gt.s32.totalorder 0, %v262
    %v264 = vsel %vm263, 0, %v262
    %v265 = vsub.s32 32, %v264
    %v266 = vshll.u32 %v257, %v264
    %v267 = vshrl.u32 %v249, %v265
    %v268 = vor.u32 %v266, %v267
    %v269 = vsub.s32 4294967266, %v264
    %v270 = vadd.s32 %v269, 127
    %v271 = vshll.u32 %v270, 23
    %v272 = vor.u32 4788187, %v271
    %v273 = vand.u32 2147483647, %v272
    %v275 = vcvt.s32.f32 %v268
    %v276 = vmul.f32 %v275, %v273
    %v277 = vxor.u32 %v276, 2147483648
    %v278 = vsel %vm195, %v277, %v276
    %v279 = vsub.s32 4, %v255
    %v280 = vsel %vm195, %v279, %v255
    %v281 = vsel %vm194, %v188, %v278
    %v282 = vsel %vm194, 0, %v280
    %v283 = vcosq.f32.pop %v281
    %v284 = vsinq.f32.pop %v281
    %vm285 = vweird.f32 %v188
    %v286 = vadd.s32 %v282, 3
    %v287 = vand.u32 %v286, 3
    %vm288 = vcmp.lt.s32.totalorder %v287, 2
    %vm289 = vcmp.eq.s32.totalorder %v287, 0
    %v290 = vxor.u32 %v284, 2147483648
    %v291 = vsel %vm289, %v283, %v290
    %vm292 = vcmp.eq.s32.totalorder %v287, 2
    %v293 = vxor.u32 %v283, 2147483648
    %v294 = vsel %vm292, %v293, %v284
    %v295 = vsel %vm288, %v291, %v294
    %v296 = vsel %vm285, nan, %v295
    %v297 = vpack.c.bf16 %v296, %v296
    %v298 = vld [vmem:[#allocation7] sm:$0xf]
    %v299 = vld [vmem:[#allocation7 + $0x4] sm:$0xf]
    %v300 = vld [vmem:[#allocation7 + $0x8] sm:$0xf]
    %v301 = vld [vmem:[#allocation7 + $0xc] sm:$0xf]
    %v302 = vld [vmem:[#allocation7 + $0x10] sm:$0xf]
    %v303 = vld [vmem:[#allocation7 + $0x14] sm:$0xf]
    %v304 = vld [vmem:[#allocation7 + $0x18] sm:$0xf]
    %v305 = vld [vmem:[#allocation7 + $0x1c] sm:$0xf]
    %v306 = vld [vmem:[#allocation7 + $0x20] sm:$0xf]
    %v307 = vld [vmem:[#allocation7 + $0x24] sm:$0xf]
    %v308 = vld [vmem:[#allocation7 + $0x28] sm:$0xf]
    %v309 = vld [vmem:[#allocation7 + $0x2c] sm:$0xf]
    %v310 = vld [vmem:[#allocation7 + $0x30] sm:$0xf]
    %v311 = vld [vmem:[#allocation7 + $0x34] sm:$0xf]
    %v312 = vld [vmem:[#allocation7 + $0x38] sm:$0xf]
    %v313 = vld [vmem:[#allocation7 + $0x3c] sm:$0xf]
    %v314 = vld [vmem:[%s4] sm:$0x1]
    %v316 = vlaneseq
    %v317 = vshrl.u32 %v316, 7
    %v318 = vsub.s32 0, %v317
    %v319 = vrot.slane %v314, %v318
    %v337 = vunpack.c.l.b16 %v298
    %v338 = vunpack.c.l.b16 %v299
    %v339 = vunpack.c.l.b16 %v300
    %v340 = vunpack.c.l.b16 %v301
    %v341 = vunpack.c.l.b16 %v302
    %v342 = vunpack.c.l.b16 %v303
    %v343 = vunpack.c.l.b16 %v304
    %v344 = vunpack.c.l.b16 %v305
    %v345 = vunpack.c.l.b16 %v306
    %v346 = vunpack.c.l.b16 %v307
    %v347 = vunpack.c.l.b16 %v308
    %v348 = vunpack.c.l.b16 %v309
    %v349 = vunpack.c.l.b16 %v310
    %v350 = vunpack.c.l.b16 %v311
    %v351 = vunpack.c.l.b16 %v312
    %v352 = vunpack.c.l.b16 %v313
    %v353 = vpack.c.b16 %v338, %v337
    %v354 = vpack.c.b16 %v340, %v339
    %v355 = vpack.c.b16 %v342, %v341
    %v356 = vpack.c.b16 %v344, %v343
    %v357 = vpack.c.b16 %v346, %v345
    %v358 = vpack.c.b16 %v348, %v347
    %v359 = vpack.c.b16 %v350, %v349
    %v360 = vpack.c.b16 %v352, %v351
    %369 = vmatprep.subr.bf16.mxu0 0
    %370 = vmatpush1.bf16.msra.mxu0 %v353
    %371 = vmatprep.subr.bf16.mxu0 0
    %372 = vmatpush1.bf16.msra.mxu0 %v354
    %373 = vmatprep.subr.bf16.mxu0 0
    %374 = vmatpush1.bf16.msra.mxu0 %v355
    %375 = vmatprep.subr.bf16.mxu0 0
    %376 = vmatpush1.bf16.msra.mxu0 %v356
    %377 = vmatprep.subr.bf16.mxu0 0
    %378 = vmatpush1.bf16.msra.mxu0 %v357
    %379 = vmatprep.subr.bf16.mxu0 0
    %380 = vmatpush1.bf16.msra.mxu0 %v358
    %381 = vmatprep.subr.bf16.mxu0 0
    %382 = vmatpush1.bf16.msra.mxu0 %v359
    %383 = vmatprep.subr.bf16.mxu0 0
    %384 = vmatpush1.bf16.msra.mxu0 %v360
    %385 = vmatprep.subr.bf16.mxu0 0
    %386 = vmatpush1.bf16.msra.mxu0 0
    %387 = vmatprep.subr.bf16.mxu0 0
    %388 = vmatpush1.bf16.msra.mxu0 0
    %389 = vmatprep.subr.bf16.mxu0 0
    %390 = vmatpush1.bf16.msra.mxu0 0
    %391 = vmatprep.subr.bf16.mxu0 0
    %392 = vmatpush1.bf16.msra.mxu0 0
    %393 = vmatprep.subr.bf16.mxu0 0
    %394 = vmatpush1.bf16.msra.mxu0 0
    %395 = vmatprep.subr.bf16.mxu0 0
    %396 = vmatpush1.bf16.msra.mxu0 0
    %397 = vmatprep.subr.bf16.mxu0 0
    %398 = vmatpush1.bf16.msra.mxu0 0
    %399 = vmatprep.subr.bf16.mxu0 0
    %400 = vmatpush1.bf16.msra.mxu0 0
    %401 = vmatprep.mubr.bf16.mxu0 0
    %402 = vmatmul.mubr.bf16.gmra.mrb[0].mxu0 %v297
    %v403 = vpop.f32.mrb[0].mxu0
    %v404 = vadd.f32 %v319, %v403
    %v405 = vpop.f32.mrb[0].mxu0
    %v406 = vpop.f32.mrb[0].mxu0
    %v407 = vpop.f32.mrb[0].mxu0
    %408 = vdwg.mxu0
    %v409 = vtanh.pop %v404
    %v410 = vpack.c.bf16 %v409, %v409
    %v411 = vld [vmem:[#allocation8] sm:$0xf]
    %v412 = vld [vmem:[#allocation8 + $0x4] sm:$0xf]
    %v413 = vld [vmem:[#allocation8 + $0x8] sm:$0xf]
    %v414 = vld [vmem:[#allocation8 + $0xc] sm:$0xf]
    %v415 = vld [vmem:[#allocation8 + $0x10] sm:$0xf]
    %v416 = vld [vmem:[#allocation8 + $0x14] sm:$0xf]
    %v417 = vld [vmem:[#allocation8 + $0x18] sm:$0xf]
    %v418 = vld [vmem:[#allocation8 + $0x1c] sm:$0xf]
    %v419 = vld [vmem:[#allocation8 + $0x20] sm:$0xf]
    %v420 = vld [vmem:[#allocation8 + $0x24] sm:$0xf]
    %v421 = vld [vmem:[#allocation8 + $0x28] sm:$0xf]
    %v422 = vld [vmem:[#allocation8 + $0x2c] sm:$0xf]
    %v423 = vld [vmem:[#allocation8 + $0x30] sm:$0xf]
    %v424 = vld [vmem:[#allocation8 + $0x34] sm:$0xf]
    %v425 = vld [vmem:[#allocation8 + $0x38] sm:$0xf]
    %v426 = vld [vmem:[#allocation8 + $0x3c] sm:$0xf]
    %v427 = vld [vmem:[%s6] sm:$0x1]
    %v429 = vlaneseq
    %v430 = vshrl.u32 %v429, 7
    %v431 = vsub.s32 0, %v430
    %v432 = vrot.slane %v427, %v431
    %v450 = vunpack.c.l.b16 %v411
    %v451 = vunpack.c.l.b16 %v412
    %v452 = vunpack.c.l.b16 %v413
    %v453 = vunpack.c.l.b16 %v414
    %v454 = vunpack.c.l.b16 %v415
    %v455 = vunpack.c.l.b16 %v416
    %v456 = vunpack.c.l.b16 %v417
    %v457 = vunpack.c.l.b16 %v418
    %v458 = vunpack.c.l.b16 %v419
    %v459 = vunpack.c.l.b16 %v420
    %v460 = vunpack.c.l.b16 %v421
    %v461 = vunpack.c.l.b16 %v422
    %v462 = vunpack.c.l.b16 %v423
    %v463 = vunpack.c.l.b16 %v424
    %v464 = vunpack.c.l.b16 %v425
    %v465 = vunpack.c.l.b16 %v426
    %v466 = vpack.c.b16 %v451, %v450
    %v467 = vpack.c.b16 %v453, %v452
    %v468 = vpack.c.b16 %v455, %v454
    %v469 = vpack.c.b16 %v457, %v456
    %v470 = vpack.c.b16 %v459, %v458
    %v471 = vpack.c.b16 %v461, %v460
    %v472 = vpack.c.b16 %v463, %v462
    %v473 = vpack.c.b16 %v465, %v464
    %482 = vmatprep.subr.bf16.mxu0 0
    %483 = vmatpush1.bf16.msra.mxu0 %v466
    %484 = vmatprep.subr.bf16.mxu0 0
    %485 = vmatpush1.bf16.msra.mxu0 %v467
    %486 = vmatprep.subr.bf16.mxu0 0
    %487 = vmatpush1.bf16.msra.mxu0 %v468
    %488 = vmatprep.subr.bf16.mxu0 0
    %489 = vmatpush1.bf16.msra.mxu0 %v469
    %490 = vmatprep.subr.bf16.mxu0 0
    %491 = vmatpush1.bf16.msra.mxu0 %v470
    %492 = vmatprep.subr.bf16.mxu0 0
    %493 = vmatpush1.bf16.msra.mxu0 %v471
    %494 = vmatprep.subr.bf16.mxu0 0
    %495 = vmatpush1.bf16.msra.mxu0 %v472
    %496 = vmatprep.subr.bf16.mxu0 0
    %497 = vmatpush1.bf16.msra.mxu0 %v473
    %498 = vmatprep.subr.bf16.mxu0 0
    %499 = vmatpush1.bf16.msra.mxu0 0
    %500 = vmatprep.subr.bf16.mxu0 0
    %501 = vmatpush1.bf16.msra.mxu0 0
    %502 = vmatprep.subr.bf16.mxu0 0
    %503 = vmatpush1.bf16.msra.mxu0 0
    %504 = vmatprep.subr.bf16.mxu0 0
    %505 = vmatpush1.bf16.msra.mxu0 0
    %506 = vmatprep.subr.bf16.mxu0 0
    %507 = vmatpush1.bf16.msra.mxu0 0
    %508 = vmatprep.subr.bf16.mxu0 0
    %509 = vmatpush1.bf16.msra.mxu0 0
    %510 = vmatprep.subr.bf16.mxu0 0
    %511 = vmatpush1.bf16.msra.mxu0 0
    %512 = vmatprep.subr.bf16.mxu0 0
    %513 = vmatpush1.bf16.msra.mxu0 0
    %514 = vmatprep.mubr.bf16.mxu0 0
    %515 = vmatmul.mubr.bf16.gmra.mrb[0].mxu0 %v410
    %v516 = vpop.f32.mrb[0].mxu0
    %v517 = vadd.f32 %v432, %v516
    %v518 = vpop.f32.mrb[0].mxu0
    %v519 = vpop.f32.mrb[0].mxu0
    %v520 = vpop.f32.mrb[0].mxu0
    %521 = vdwg.mxu0
    %v522 = vpack.c.bf16 %v517, %v517
    %523 = vst [vmem:[#allocation10] sm:$0xf] %v522
    // Predicated region
    $region46: #{tpu_custom_call.1} parent=1 // pred_check
      _
    $region47: #{tpu_custom_call.1} parent=1 // pred_check_branch
      %525 = sbr.rel (0) target = $region49
    $region48: #{tpu_custom_call.1} parent=1 // pred_region
      %s527 = ssub.s32 64, 64
      %528 = vsyncadd [#allocation4], %s527
      %s530 = sshll.u32 [#allocation10], 4
      %s531 = int_to_ptr.vmem [resolvable:$true] %s530
      %533 = dma.vmem_to_hbm [thread:$0]  %s531, 64, %s7, [#allocation4]
    $region49: #{tpu_custom_call.1} parent=1 // pred_fallthru
      _
    // Predicated region
    $region50: #{tpu_custom_call.1} parent=1 // pred_check
      _
    $region51: #{tpu_custom_call.1} parent=1 // pred_check_branch
      %535 = sbr.rel (0) target = $region53
    $region52: #{tpu_custom_call.1} parent=1 // pred_region
      %536 = dma.done [#allocation4], 64
    $region53: #{tpu_custom_call.1} parent=1 // pred_fallthru
      _
    %537 = vsyncpa [#allocation3], 1
    %538 = vsyncpa [#allocation6], 1
    %539 = vsyncpa [#allocation9], 1
    %540 = vsyncpa [#allocation4], 1

// kernel: tpu_custom_call.1
$region0: #{tpu_custom_call.1}
  #allocation0 [shape = 'u32[]', space=smem, size = 0x4, offset = 0x4, fixed_abs, tag = 'smem constant byte address 0x4 - core index']
  #allocation1 [shape = 'u32[144,128]{1,0:T(1,128)}', space=vmem, size = 0x12000, scoped, tag = 'internal scratch']
  %s0 = inlined_call_operand.hbm [shape: bf16[8,128], index: 0, kind: input, shape index: {}]
  %s1 = inlined_call_operand.hbm [shape: bf16[128,128], index: 1, kind: input, shape index: {}]
  %s2 = inlined_call_operand.vmem [shape: f32[1,128], index: 2, kind: input, shape index: {}]
  %s3 = inlined_call_operand.hbm [shape: bf16[128,128], index: 3, kind: input, shape index: {}]
  %s4 = inlined_call_operand.vmem [shape: f32[1,128], index: 4, kind: input, shape index: {}]
  %s5 = inlined_call_operand.hbm [shape: bf16[128,128], index: 5, kind: input, shape index: {}]
  %s6 = inlined_call_operand.vmem [shape: f32[1,128], index: 6, kind: input, shape index: {}]
  %s7 = inlined_call_operand.hbm [shape: bf16[8,128], index: 7, kind: output, shape index: {}]
  %s8 = sld [smem:[#allocation0]]
  $region54: #{tpu_custom_call.1} parent=0
    _
  %s10 = ssub.s32 1, %s8
  %s11 = scalar_select 0, %s10, %s8
  $region1: #{tpu_custom_call.1} parent=0
    #allocation2 [shape = 'u8[2048]{0}', space=vmem, size = 0x800, scoped, tag = 'input window, operand 0, single buffered']
    #allocation3 [shape = 's32[1]{0}', space=sflag, size = 0x4, scoped, tag = 'scoped memory for tpu_custom_call.1']
    #allocation4 [shape = 's32[1]{0}', space=sflag, size = 0x4, scoped, tag = 'scoped memory for tpu_custom_call.1']
    #allocation5 [shape = 'u8[32768]{0}', space=vmem, size = 0x8000, scoped, tag = 'input window, operand 1, single buffered']
    #allocation6 [shape = 's32[1]{0}', space=sflag, size = 0x4, scoped, tag = 'scoped memory for tpu_custom_call.1']
    #allocation7 [shape = 'u8[32768]{0}', space=vmem, size = 0x8000, scoped, tag = 'input window, operand 3, single buffered']
    #allocation8 [shape = 'u8[32768]{0}', space=vmem, size = 0x8000, scoped, tag = 'input window, operand 5, single buffered']
    #allocation9 [shape = 's32[1]{0}', space=sflag, size = 0x4, scoped, tag = 'scoped memory for tpu_custom_call.1']
    #allocation10 [shape = 'u8[2048]{0}', space=vmem, size = 0x800, scoped, tag = 'output window, operand 0, single buffered']
    %12 = vsyncpa [#allocation3], 0
    %13 = vsyncpa [#allocation6], 0
    %14 = vsyncpa [#allocation9], 0
    %15 = vsyncpa [#allocation4], 0
    // Predicated region
    $region2: #{tpu_custom_call.1} parent=1 // pred_check
      _
    $region3: #{tpu_custom_call.1} parent=1 // pred_check_branch
      %17 = sbr.rel (0) target = $region5
    $region4: #{tpu_custom_call.1} parent=1 // pred_region
      %s19 = ssub.s32 64, 64
      %20 = vsyncadd [#allocation3], %s19
      %s22 = sshll.u32 [#allocation2], 4
      %s23 = int_to_ptr.vmem [resolvable:$true] %s22
      %25 = dma.hbm_to_vmem [thread:$0]  %s0, 64, %s23, [#allocation3]
    $region5: #{tpu_custom_call.1} parent=1 // pred_fallthru
      _
    // Predicated region
    $region6: #{tpu_custom_call.1} parent=1 // pred_check
      _
    $region7: #{tpu_custom_call.1} parent=1 // pred_check_branch
      %27 = sbr.rel (0) target = $region9
    $region8: #{tpu_custom_call.1} parent=1 // pred_region
      %s29 = ssub.s32 1024, 1024
      %30 = vsyncadd [#allocation6], %s29
      %s31 = sshll.u32 [#allocation5], 4
      %s32 = int_to_ptr.vmem [resolvable:$true] %s31
      %37 = dma.hbm_to_vmem [thread:$0]  %s1, 1024, %s32, [#allocation6], 64, 64, 4
    $region9: #{tpu_custom_call.1} parent=1 // pred_fallthru
      _
    // Predicated region
    $region10: #{tpu_custom_call.1} parent=1 // pred_check
      _
    $region11: #{tpu_custom_call.1} parent=1 // pred_check_branch
      %39 = sbr.rel (0) target = $region13
    $region12: #{tpu_custom_call.1} parent=1 // pred_region
      _
    $region13: #{tpu_custom_call.1} parent=1 // pred_fallthru
      _
    // Predicated region
    $region14: #{tpu_custom_call.1} parent=1 // pred_check
      _
    $region15: #{tpu_custom_call.1} parent=1 // pred_check_branch
      %41 = sbr.rel (0) target = $region17
    $region16: #{tpu_custom_call.1} parent=1 // pred_region
      %s43 = ssub.s32 1024, 1024
      %44 = vsyncadd [#allocation6], %s43
      %s45 = sshll.u32 [#allocation7], 4
      %s46 = int_to_ptr.vmem [resolvable:$true] %s45
      %51 = dma.hbm_to_vmem [thread:$0]  %s3, 1024, %s46, [#allocation6], 64, 64, 4
    $region17: #{tpu_custom_call.1} parent=1 // pred_fallthru
      _
    // Predicated region
    $region18: #{tpu_custom_call.1} parent=1 // pred_check
      _
    $region19: #{tpu_custom_call.1} parent=1 // pred_check_branch
      %53 = sbr.rel (0) target = $region21
    $region20: #{tpu_custom_call.1} parent=1 // pred_region
      _
    $region21: #{tpu_custom_call.1} parent=1 // pred_fallthru
      _
    // Predicated region
    $region22: #{tpu_custom_call.1} parent=1 // pred_check
      _
    $region23: #{tpu_custom_call.1} parent=1 // pred_check_branch
      %55 = sbr.rel (0) target = $region25
    $region24: #{tpu_custom_call.1} parent=1 // pred_region
      %s57 = ssub.s32 1024, 1024
      %58 = vsyncadd [#allocation9], %s57
      %s59 = sshll.u32 [#allocation8], 4
      %s60 = int_to_ptr.vmem [resolvable:$true] %s59
      %65 = dma.hbm_to_vmem [thread:$0]  %s5, 1024, %s60, [#allocation9], 64, 64, 4
    $region25: #{tpu_custom_call.1} parent=1 // pred_fallthru
      _
    // Predicated region
    $region26: #{tpu_custom_call.1} parent=1 // pred_check
      _
    $region27: #{tpu_custom_call.1} parent=1 // pred_check_branch
      %67 = sbr.rel (0) target = $region29
    $region28: #{tpu_custom_call.1} parent=1 // pred_region
      _
    $region29: #{tpu_custom_call.1} parent=1 // pred_fallthru
      _
    // Predicated region
    $region30: #{tpu_custom_call.1} parent=1 // pred_check
      _
    $region31: #{tpu_custom_call.1} parent=1 // pred_check_branch
      %69 = sbr.rel (0) target = $region33
    $region32: #{tpu_custom_call.1} parent=1 // pred_region
      %70 = dma.done [#allocation3], 64
    $region33: #{tpu_custom_call.1} parent=1 // pred_fallthru
      _
    // Predicated region
    $region34: #{tpu_custom_call.1} parent=1 // pred_check
      _
    $region35: #{tpu_custom_call.1} parent=1 // pred_check_branch
      %72 = sbr.rel (0) target = $region37
    $region36: #{tpu_custom_call.1} parent=1 // pred_region
      %73 = dma.done [#allocation6], 1024
    $region37: #{tpu_custom_call.1} parent=1 // pred_fallthru
      _
    // Predicated region
    $region38: #{tpu_custom_call.1} parent=1 // pred_check
      _
    $region39: #{tpu_custom_call.1} parent=1 // pred_check_branch
      %75 = sbr.rel (0) target = $region41
    $region40: #{tpu_custom_call.1} parent=1 // pred_region
      %76 = dma.done [#allocation6], 1024
    $region41: #{tpu_custom_call.1} parent=1 // pred_fallthru
      _
    // Predicated region
    $region42: #{tpu_custom_call.1} parent=1 // pred_check
      _
    $region43: #{tpu_custom_call.1} parent=1 // pred_check_branch
      %78 = sbr.rel (0) target = $region45
    $region44: #{tpu_custom_call.1} parent=1 // pred_region
      %79 = dma.done [#allocation9], 1024
    $region45: #{tpu_custom_call.1} parent=1 // pred_fallthru
      _
    %v81 = vld [vmem:[#allocation2] sm:$0xf]
    %v82 = vld [vmem:[#allocation5] sm:$0xf]
    %v83 = vld [vmem:[#allocation5 + $0x4] sm:$0xf]
    %v84 = vld [vmem:[#allocation5 + $0x8] sm:$0xf]
    %v85 = vld [vmem:[#allocation5 + $0xc] sm:$0xf]
    %v86 = vld [vmem:[#allocation5 + $0x10] sm:$0xf]
    %v87 = vld [vmem:[#allocation5 + $0x14] sm:$0xf]
    %v88 = vld [vmem:[#allocation5 + $0x18] sm:$0xf]
    %v89 = vld [vmem:[#allocation5 + $0x1c] sm:$0xf]
    %v90 = vld [vmem:[#allocation5 + $0x20] sm:$0xf]
    %v91 = vld [vmem:[#allocation5 + $0x24] sm:$0xf]
    %v92 = vld [vmem:[#allocation5 + $0x28] sm:$0xf]
    %v93 = vld [vmem:[#allocation5 + $0x2c] sm:$0xf]
    %v94 = vld [vmem:[#allocation5 + $0x30] sm:$0xf]
    %v95 = vld [vmem:[#allocation5 + $0x34] sm:$0xf]
    %v96 = vld [vmem:[#allocation5 + $0x38] sm:$0xf]
    %v97 = vld [vmem:[#allocation5 + $0x3c] sm:$0xf]
    %v98 = vld [vmem:[%s2] sm:$0x1]
    %v100 = vlaneseq
    %v101 = vshrl.u32 %v100, 7
    %v102 = vsub.s32 0, %v101
    %v103 = vrot.slane %v98, %v102
    %v121 = vunpack.c.l.b16 %v82
    %v122 = vunpack.c.l.b16 %v83
    %v123 = vunpack.c.l.b16 %v84
    %v124 = vunpack.c.l.b16 %v85
    %v125 = vunpack.c.l.b16 %v86
    %v126 = vunpack.c.l.b16 %v87
    %v127 = vunpack.c.l.b16 %v88
    %v128 = vunpack.c.l.b16 %v89
    %v129 = vunpack.c.l.b16 %v90
    %v130 = vunpack.c.l.b16 %v91
    %v131 = vunpack.c.l.b16 %v92
    %v132 = vunpack.c.l.b16 %v93
    %v133 = vunpack.c.l.b16 %v94
    %v134 = vunpack.c.l.b16 %v95
    %v135 = vunpack.c.l.b16 %v96
    %v136 = vunpack.c.l.b16 %v97
    %v137 = vpack.c.b16 %v122, %v121
    %v138 = vpack.c.b16 %v124, %v123
    %v139 = vpack.c.b16 %v126, %v125
    %v140 = vpack.c.b16 %v128, %v127
    %v141 = vpack.c.b16 %v130, %v129
    %v142 = vpack.c.b16 %v132, %v131
    %v143 = vpack.c.b16 %v134, %v133
    %v144 = vpack.c.b16 %v136, %v135
    %153 = vmatprep.subr.bf16.mxu0 0
    %154 = vmatpush1.bf16.msra.mxu0 %v137
    %155 = vmatprep.subr.bf16.mxu0 0
    %156 = vmatpush1.bf16.msra.mxu0 %v138
    %157 = vmatprep.subr.bf16.mxu0 0
    %158 = vmatpush1.bf16.msra.mxu0 %v139
    %159 = vmatprep.subr.bf16.mxu0 0
    %160 = vmatpush1.bf16.msra.mxu0 %v140
    %161 = vmatprep.subr.bf16.mxu0 0
    %162 = vmatpush1.bf16.msra.mxu0 %v141
    %163 = vmatprep.subr.bf16.mxu0 0
    %164 = vmatpush1.bf16.msra.mxu0 %v142
    %165 = vmatprep.subr.bf16.mxu0 0
    %166 = vmatpush1.bf16.msra.mxu0 %v143
    %167 = vmatprep.subr.bf16.mxu0 0
    %168 = vmatpush1.bf16.msra.mxu0 %v144
    %169 = vmatprep.subr.bf16.mxu0 0
    %170 = vmatpush1.bf16.msra.mxu0 0
    %171 = vmatprep.subr.bf16.mxu0 0
    %172 = vmatpush1.bf16.msra.mxu0 0
    %173 = vmatprep.subr.bf16.mxu0 0
    %174 = vmatpush1.bf16.msra.mxu0 0
    %175 = vmatprep.subr.bf16.mxu0 0
    %176 = vmatpush1.bf16.msra.mxu0 0
    %177 = vmatprep.subr.bf16.mxu0 0
    %178 = vmatpush1.bf16.msra.mxu0 0
    %179 = vmatprep.subr.bf16.mxu0 0
    %180 = vmatpush1.bf16.msra.mxu0 0
    %181 = vmatprep.subr.bf16.mxu0 0
    %182 = vmatpush1.bf16.msra.mxu0 0
    %183 = vmatprep.subr.bf16.mxu0 0
    %184 = vmatpush1.bf16.msra.mxu0 0
    %185 = vmatprep.mubr.bf16.mxu0 0
    %186 = vmatmul.mubr.bf16.gmra.mrb[0].mxu0 %v81
    %v187 = vpop.f32.mrb[0].mxu0
    %v188 = vadd.f32 %v103, %v187
    %v189 = vpop.f32.mrb[0].mxu0
    %v190 = vpop.f32.mrb[0].mxu0
    %v191 = vpop.f32.mrb[0].mxu0
    %192 = vdwg.mxu0
    %v193 = vand.u32 2147483647, %v188
    %vm194 = vcmp.le.f32.partialorder %v193, 0.7853982
    %vm195 = vcmp.lt.s32.totalorder %v188, 0
    %v196 = vand.u32 %v188, 2139095040
    %v197 = vshrl.u32 %v196, 23
    %v198 = vsub.s32 %v197, 127
    %v199 = vand.u32 2147483647, %v188
    %v200 = vand.u32 %v199, 8388607
    %v201 = vor.u32 %v200, 8388608
    %v202 = vsub.s32 0, %v201
    %v203 = vadd.s32 %v198, 1
    %vm204 = vcmp.gt.s32.totalorder %v203, 0
    %v205 = vsel %vm204, %v203, 0
    %v206 = vshrl.u32 %v205, 5
    %v207 = vand.u32 %v205, 31
    %v208 = vsub.s32 32, %v207
    %v209 = vshrl.u32 683565275, %v208
    %v210 = vshll.u32 683565275, %v207
    %v211 = vshrl.u32 2475754826, %v208
    %v212 = vor.u32 %v210, %v211
    %v213 = vshll.u32 2475754826, %v207
    %v214 = vshrl.u32 2131351028, %v208
    %v215 = vor.u32 %v213, %v214
    %v216 = vshll.u32 2131351028, %v207
    %v217 = vshrl.u32 2102212464, %v208
    %v218 = vor.u32 %v216, %v217
    %v219 = vshll.u32 2102212464, %v207
    %v220 = vshrl.u32 920167782, %v208
    %v221 = vor.u32 %v219, %v220
    %v222 = vshll.u32 920167782, %v207
    %v223 = vshrl.u32 1326507024, %v208
    %v224 = vor.u32 %v222, %v223
    %vm225 = vcmp.lt.s32.totalorder %v206, 1
    %vm226 = vcmp.lt.s32.totalorder %v206, 2
    %vm227 = vcmp.lt.s32.totalorder %v206, 3
    %vm228 = vcmp.lt.s32.totalorder %v206, 4
    %v229 = vsel %vm225, %v209, %v212
    %v230 = vsel %vm228, %v218, 2102212464
    %v231 = vsel %vm227, %v215, %v230
    %v232 = vsel %vm226, %v229, %v231
    %v233 = vsel %vm225, %v212, %v215
    %v234 = vsel %vm228, %v221, 920167782
    %v235 = vsel %vm227, %v218, %v234
    %v236 = vsel %vm226, %v233, %v235
    %v237 = vsel %vm225, %v215, %v218
    %v238 = vsel %vm228, %v224, 1326507024
    %v239 = vsel %vm227, %v221, %v238
    %v240 = vsel %vm226, %v237, %v239
    %v241 = vshll.u32 %v201, 8
    %v242 = vmul.u32.u64.compose %v241, %v240
    %v243 = vextract.low.u32 %v242
    %v244 = vextract.high.u32 %v242
    %v245 = vmul.u32.u64.compose %v241, %v236
    %v246 = vextract.low.u32 %v245
    %v247 = vextract.high.u32 %v245
    %v248 = vmul.u32 %v241, %v232
    %v249 = vadd.s32 %v244, %v246
    %vm250 = vc.u32 %v244, %v246
    %v251 = vadd.s32 %v247, 1
    %v252 = vsel %vm250, %v251, %v247
    %v253 = vadd.s32 %v248, %v252
    %v254 = vadd.s32 %v253, 536870912
    %v255 = vshrl.u32 %v254, 30
    %v256 = vshll.u32 %v255, 30
    %v257 = vsub.s32 %v253, %v256
    %vm258 = vcmp.lt.s32.totalorder %v257, 0
    %v259 = vsub.s32 0, %v257
    %v260 = vsel %vm258, %v259, %v257
    %v261 = vclz %v260
    %v262 = vsub.s32 %v261, 2
    %vm263 = vcmp.gt.s32.totalorder 0, %v262
    %v264 = vsel %vm263, 0, %v262
    %v265 = vsub.s32 32, %v264
    %v266 = vshll.u32 %v257, %v264
    %v267 = vshrl.u32 %v249, %v265
    %v268 = vor.u32 %v266, %v267
    %v269 = vsub.s32 4294967266, %v264
    %v270 = vadd.s32 %v269, 127
    %v271 = vshll.u32 %v270, 23
    %v272 = vor.u32 4788187, %v271
    %v273 = vand.u32 2147483647, %v272
    %v275 = vcvt.s32.f32 %v268
    %v276 = vmul.f32 %v275, %v273
    %v277 = vxor.u32 %v276, 2147483648
    %v278 = vsel %vm195, %v277, %v276
    %v279 = vsub.s32 4, %v255
    %v280 = vsel %vm195, %v279, %v255
    %v281 = vsel %vm194, %v188, %v278
    %v282 = vsel %vm194, 0, %v280
    %v283 = vcosq.f32.pop %v281
    %v284 = vsinq.f32.pop %v281
    %vm285 = vweird.f32 %v188
    %v286 = vadd.s32 %v282, 3
    %v287 = vand.u32 %v286, 3
    %vm288 = vcmp.lt.s32.totalorder %v287, 2
    %vm289 = vcmp.eq.s32.totalorder %v287, 0
    %v290 = vxor.u32 %v284, 2147483648
    %v291 = vsel %vm289, %v283, %v290
    %vm292 = vcmp.eq.s32.totalorder %v287, 2
    %v293 = vxor.u32 %v283, 2147483648
    %v294 = vsel %vm292, %v293, %v284
    %v295 = vsel %vm288, %v291, %v294
    %v296 = vsel %vm285, nan, %v295
    %v297 = vpack.c.bf16 %v296, %v296
    %v298 = vld [vmem:[#allocation7] sm:$0xf]
    %v299 = vld [vmem:[#allocation7 + $0x4] sm:$0xf]
    %v300 = vld [vmem:[#allocation7 + $0x8] sm:$0xf]
    %v301 = vld [vmem:[#allocation7 + $0xc] sm:$0xf]
    %v302 = vld [vmem:[#allocation7 + $0x10] sm:$0xf]
    %v303 = vld [vmem:[#allocation7 + $0x14] sm:$0xf]
    %v304 = vld [vmem:[#allocation7 + $0x18] sm:$0xf]
    %v305 = vld [vmem:[#allocation7 + $0x1c] sm:$0xf]
    %v306 = vld [vmem:[#allocation7 + $0x20] sm:$0xf]
    %v307 = vld [vmem:[#allocation7 + $0x24] sm:$0xf]
    %v308 = vld [vmem:[#allocation7 + $0x28] sm:$0xf]
    %v309 = vld [vmem:[#allocation7 + $0x2c] sm:$0xf]
    %v310 = vld [vmem:[#allocation7 + $0x30] sm:$0xf]
    %v311 = vld [vmem:[#allocation7 + $0x34] sm:$0xf]
    %v312 = vld [vmem:[#allocation7 + $0x38] sm:$0xf]
    %v313 = vld [vmem:[#allocation7 + $0x3c] sm:$0xf]
    %v314 = vld [vmem:[%s4] sm:$0x1]
    %v316 = vlaneseq
    %v317 = vshrl.u32 %v316, 7
    %v318 = vsub.s32 0, %v317
    %v319 = vrot.slane %v314, %v318
    %v337 = vunpack.c.l.b16 %v298
    %v338 = vunpack.c.l.b16 %v299
    %v339 = vunpack.c.l.b16 %v300
    %v340 = vunpack.c.l.b16 %v301
    %v341 = vunpack.c.l.b16 %v302
    %v342 = vunpack.c.l.b16 %v303
    %v343 = vunpack.c.l.b16 %v304
    %v344 = vunpack.c.l.b16 %v305
    %v345 = vunpack.c.l.b16 %v306
    %v346 = vunpack.c.l.b16 %v307
    %v347 = vunpack.c.l.b16 %v308
    %v348 = vunpack.c.l.b16 %v309
    %v349 = vunpack.c.l.b16 %v310
    %v350 = vunpack.c.l.b16 %v311
    %v351 = vunpack.c.l.b16 %v312
    %v352 = vunpack.c.l.b16 %v313
    %v353 = vpack.c.b16 %v338, %v337
    %v354 = vpack.c.b16 %v340, %v339
    %v355 = vpack.c.b16 %v342, %v341
    %v356 = vpack.c.b16 %v344, %v343
    %v357 = vpack.c.b16 %v346, %v345
    %v358 = vpack.c.b16 %v348, %v347
    %v359 = vpack.c.b16 %v350, %v349
    %v360 = vpack.c.b16 %v352, %v351
    %369 = vmatprep.subr.bf16.mxu0 0
    %370 = vmatpush1.bf16.msra.mxu0 %v353
    %371 = vmatprep.subr.bf16.mxu0 0
    %372 = vmatpush1.bf16.msra.mxu0 %v354
    %373 = vmatprep.subr.bf16.mxu0 0
    %374 = vmatpush1.bf16.msra.mxu0 %v355
    %375 = vmatprep.subr.bf16.mxu0 0
    %376 = vmatpush1.bf16.msra.mxu0 %v356
    %377 = vmatprep.subr.bf16.mxu0 0
    %378 = vmatpush1.bf16.msra.mxu0 %v357
    %379 = vmatprep.subr.bf16.mxu0 0
    %380 = vmatpush1.bf16.msra.mxu0 %v358
    %381 = vmatprep.subr.bf16.mxu0 0
    %382 = vmatpush1.bf16.msra.mxu0 %v359
    %383 = vmatprep.subr.bf16.mxu0 0
    %384 = vmatpush1.bf16.msra.mxu0 %v360
    %385 = vmatprep.subr.bf16.mxu0 0
    %386 = vmatpush1.bf16.msra.mxu0 0
    %387 = vmatprep.subr.bf16.mxu0 0
    %388 = vmatpush1.bf16.msra.mxu0 0
    %389 = vmatprep.subr.bf16.mxu0 0
    %390 = vmatpush1.bf16.msra.mxu0 0
    %391 = vmatprep.subr.bf16.mxu0 0
    %392 = vmatpush1.bf16.msra.mxu0 0
    %393 = vmatprep.subr.bf16.mxu0 0
    %394 = vmatpush1.bf16.msra.mxu0 0
    %395 = vmatprep.subr.bf16.mxu0 0
    %396 = vmatpush1.bf16.msra.mxu0 0
    %397 = vmatprep.subr.bf16.mxu0 0
    %398 = vmatpush1.bf16.msra.mxu0 0
    %399 = vmatprep.subr.bf16.mxu0 0
    %400 = vmatpush1.bf16.msra.mxu0 0
    %401 = vmatprep.mubr.bf16.mxu0 0
    %402 = vmatmul.mubr.bf16.gmra.mrb[0].mxu0 %v297
    %v403 = vpop.f32.mrb[0].mxu0
    %v404 = vadd.f32 %v319, %v403
    %v405 = vpop.f32.mrb[0].mxu0
    %v406 = vpop.f32.mrb[0].mxu0
    %v407 = vpop.f32.mrb[0].mxu0
    %408 = vdwg.mxu0
    %v409 = vtanh.pop %v404
    %v410 = vpack.c.bf16 %v409, %v409
    %v411 = vld [vmem:[#allocation8] sm:$0xf]
    %v412 = vld [vmem:[#allocation8 + $0x4] sm:$0xf]
    %v413 = vld [vmem:[#allocation8 + $0x8] sm:$0xf]
    %v414 = vld [vmem:[#allocation8 + $0xc] sm:$0xf]
    %v415 = vld [vmem:[#allocation8 + $0x10] sm:$0xf]
    %v416 = vld [vmem:[#allocation8 + $0x14] sm:$0xf]
    %v417 = vld [vmem:[#allocation8 + $0x18] sm:$0xf]
    %v418 = vld [vmem:[#allocation8 + $0x1c] sm:$0xf]
    %v419 = vld [vmem:[#allocation8 + $0x20] sm:$0xf]
    %v420 = vld [vmem:[#allocation8 + $0x24] sm:$0xf]
    %v421 = vld [vmem:[#allocation8 + $0x28] sm:$0xf]
    %v422 = vld [vmem:[#allocation8 + $0x2c] sm:$0xf]
    %v423 = vld [vmem:[#allocation8 + $0x30] sm:$0xf]
    %v424 = vld [vmem:[#allocation8 + $0x34] sm:$0xf]
    %v425 = vld [vmem:[#allocation8 + $0x38] sm:$0xf]
    %v426 = vld [vmem:[#allocation8 + $0x3c] sm:$0xf]
    %v427 = vld [vmem:[%s6] sm:$0x1]
    %v429 = vlaneseq
    %v430 = vshrl.u32 %v429, 7
    %v431 = vsub.s32 0, %v430
    %v432 = vrot.slane %v427, %v431
    %v450 = vunpack.c.l.b16 %v411
    %v451 = vunpack.c.l.b16 %v412
    %v452 = vunpack.c.l.b16 %v413
    %v453 = vunpack.c.l.b16 %v414
    %v454 = vunpack.c.l.b16 %v415
    %v455 = vunpack.c.l.b16 %v416
    %v456 = vunpack.c.l.b16 %v417
    %v457 = vunpack.c.l.b16 %v418
    %v458 = vunpack.c.l.b16 %v419
    %v459 = vunpack.c.l.b16 %v420
    %v460 = vunpack.c.l.b16 %v421
    %v461 = vunpack.c.l.b16 %v422
    %v462 = vunpack.c.l.b16 %v423
    %v463 = vunpack.c.l.b16 %v424
    %v464 = vunpack.c.l.b16 %v425
    %v465 = vunpack.c.l.b16 %v426
    %v466 = vpack.c.b16 %v451, %v450
    %v467 = vpack.c.b16 %v453, %v452
    %v468 = vpack.c.b16 %v455, %v454
    %v469 = vpack.c.b16 %v457, %v456
    %v470 = vpack.c.b16 %v459, %v458
    %v471 = vpack.c.b16 %v461, %v460
    %v472 = vpack.c.b16 %v463, %v462
    %v473 = vpack.c.b16 %v465, %v464
    %482 = vmatprep.subr.bf16.mxu0 0
    %483 = vmatpush1.bf16.msra.mxu0 %v466
    %484 = vmatprep.subr.bf16.mxu0 0
    %485 = vmatpush1.bf16.msra.mxu0 %v467
    %486 = vmatprep.subr.bf16.mxu0 0
    %487 = vmatpush1.bf16.msra.mxu0 %v468
    %488 = vmatprep.subr.bf16.mxu0 0
    %489 = vmatpush1.bf16.msra.mxu0 %v469
    %490 = vmatprep.subr.bf16.mxu0 0
    %491 = vmatpush1.bf16.msra.mxu0 %v470
    %492 = vmatprep.subr.bf16.mxu0 0
    %493 = vmatpush1.bf16.msra.mxu0 %v471
    %494 = vmatprep.subr.bf16.mxu0 0
    %495 = vmatpush1.bf16.msra.mxu0 %v472
    %496 = vmatprep.subr.bf16.mxu0 0
    %497 = vmatpush1.bf16.msra.mxu0 %v473
    %498 = vmatprep.subr.bf16.mxu0 0
    %499 = vmatpush1.bf16.msra.mxu0 0
    %500 = vmatprep.subr.bf16.mxu0 0
    %501 = vmatpush1.bf16.msra.mxu0 0
    %502 = vmatprep.subr.bf16.mxu0 0
    %503 = vmatpush1.bf16.msra.mxu0 0
    %504 = vmatprep.subr.bf16.mxu0 0
    %505 = vmatpush1.bf16.msra.mxu0 0
    %506 = vmatprep.subr.bf16.mxu0 0
    %507 = vmatpush1.bf16.msra.mxu0 0
    %508 = vmatprep.subr.bf16.mxu0 0
    %509 = vmatpush1.bf16.msra.mxu0 0
    %510 = vmatprep.subr.bf16.mxu0 0
    %511 = vmatpush1.bf16.msra.mxu0 0
    %512 = vmatprep.subr.bf16.mxu0 0
    %513 = vmatpush1.bf16.msra.mxu0 0
    %514 = vmatprep.mubr.bf16.mxu0 0
    %515 = vmatmul.mubr.bf16.gmra.mrb[0].mxu0 %v410
    %v516 = vpop.f32.mrb[0].mxu0
    %v517 = vadd.f32 %v432, %v516
    %v518 = vpop.f32.mrb[0].mxu0
    %v519 = vpop.f32.mrb[0].mxu0
    %v520 = vpop.f32.mrb[0].mxu0
    %521 = vdwg.mxu0
    %v522 = vpack.c.bf16 %v517, %v517
    %523 = vst [vmem:[#allocation10] sm:$0xf] %v522
    // Predicated region
    $region46: #{tpu_custom_call.1} parent=1 // pred_check
      _
    $region47: #{tpu_custom_call.1} parent=1 // pred_check_branch
      %525 = sbr.rel (0) target = $region49
    $region48: #{tpu_custom_call.1} parent=1 // pred_region
      %s527 = ssub.s32 64, 64
      %528 = vsyncadd [#allocation4], %s527
      %s530 = sshll.u32 [#allocation10], 4
      %s531 = int_to_ptr.vmem [resolvable:$true] %s530
      %533 = dma.vmem_to_hbm [thread:$0]  %s531, 64, %s7, [#allocation4]
    $region49: #{tpu_custom_call.1} parent=1 // pred_fallthru
      _
    // Predicated region
    $region50: #{tpu_custom_call.1} parent=1 // pred_check
      _
    $region51: #{tpu_custom_call.1} parent=1 // pred_check_branch
      %535 = sbr.rel (0) target = $region53
    $region52: #{tpu_custom_call.1} parent=1 // pred_region
      %536 = dma.done [#allocation4], 64
    $region53: #{tpu_custom_call.1} parent=1 // pred_fallthru
      _
    %537 = vsyncpa [#allocation3], 1
    %538 = vsyncpa [#allocation6], 1
    %539 = vsyncpa [#allocation9], 1
    %540 = vsyncpa [#allocation4], 1

</llo_original>
